<compile_context>
chip_gen: v6e
topology: v6e:2x2x1
jax: 0.10.0
libtpu: 0.0.40
codegen_flags: <defaults>
</compile_context>

<pallas_src>
import functools

import jax
import jax.numpy as jnp
from jax.experimental import pallas as pl
from jax.experimental.pallas import tpu as pltpu

D_IN, D_HID, D_OUT = 256, 128, 256


def _lin_model_kernel(x_ref, w_ref, b_ref, o_ref):
    # In-kernel cast of the x tile to the compute dtype (no-op for f32 path).
    x = x_ref[...].astype(w_ref.dtype)
    # Fused lin2(lin1(x)): (TB, 256) @ (256, 256) -> (TB, 256), f32 accumulate.
    y = jnp.dot(x, w_ref[...], preferred_element_type=jnp.float32)
    o_ref[...] = (y + b_ref[...]).astype(o_ref.dtype)


def prepare_params(w1, b1, w2, b2, *, io_dtype=jnp.bfloat16):
    """One-time parameter fold, hoisted out of the per-call forward path.

    PyTorch nn.Linear stores weights as (out, in).  Since LinModel has no
    nonlinearity:
        y = (x @ W1^T + b1) @ W2^T + b2 = x @ (W1^T @ W2^T) + (b1 @ W2^T + b2)
    The fused weight is composed in float32 and only then cast to io_dtype
    (avoids compounding bf16 rounding).  The fused bias stays f32 (added in
    f32 inside the kernel).
    """
    w1f = jnp.asarray(w1, jnp.float32)           # (128, 256)
    b1f = jnp.asarray(b1, jnp.float32)           # (128,)
    w2f = jnp.asarray(w2, jnp.float32)           # (256, 128)
    b2f = jnp.asarray(b2, jnp.float32)           # (256,)
    w_fused = jnp.dot(w1f.T, w2f.T, precision="highest").astype(io_dtype)  # (256, 256)
    b_fused = (jnp.dot(b1f, w2f.T, precision="highest") + b2f).reshape(1, D_OUT)  # (1, 256) f32
    return w_fused, b_fused


@functools.partial(jax.jit, static_argnames=("block_b", "out_dtype"))
def lin_model_forward(x, w_fused, b_fused, *, block_b=2048, out_dtype=None):
    """x: (B, 256) (any float dtype, stays in its storage dtype in HBM).

    Returns (B, 256) in `out_dtype` (defaults to the weights' compute dtype).
    """
    B, d_in = x.shape
    assert d_in == D_IN
    io_dtype = jnp.dtype(w_fused.dtype)
    out_dtype = io_dtype if out_dtype is None else jnp.dtype(out_dtype)

    # Batch tile: multiple of 16 (bf16 packs 2 rows/sublane), capped so the
    # grid has >= 2 tiles whenever possible (v7x: two TensorCores share the
    # "parallel" grid axis), and capped by block_b for VMEM.
    if B <= 16:
        tb = B
    else:
        half = -(-B // 2)                 # cdiv(B, 2)
        half = -(-half // 16) * 16        # round up to multiple of 16
        tb = min(block_b, half)
        tb = max(16, (tb // 16) * 16)
    grid = (pl.cdiv(B, tb),)

    # Double-buffered VMEM estimate (x tile + out tile pipelined, weights resident).
    x_bytes = tb * D_IN * jnp.dtype(x.dtype).itemsize
    o_bytes = tb * D_OUT * out_dtype.itemsize
    w_bytes = D_IN * D_OUT * io_dtype.itemsize + D_OUT * 4
    vmem_needed = 2 * (x_bytes + o_bytes) + w_bytes

    cp_kwargs = dict(dimension_semantics=("parallel",))
    if vmem_needed > 12 * 1024 * 1024:
        # v5e's scoped default is only 16 MiB; raise it but stay well under
        # v7x's 64 MiB physical VMEM.
        cp_kwargs["vmem_limit_bytes"] = int(
            min(vmem_needed * 3 // 2 + (2 << 20), 60 * 1024 * 1024))

    cost = pl.CostEstimate(
        flops=2 * B * D_IN * D_OUT + B * D_OUT,
        transcendentals=0,
        bytes_accessed=(B * D_IN * jnp.dtype(x.dtype).itemsize
                        + D_IN * D_OUT * io_dtype.itemsize
                        + D_OUT * 4
                        + B * D_OUT * out_dtype.itemsize),
    )

    return pl.pallas_call(
        _lin_model_kernel,
        out_shape=jax.ShapeDtypeStruct((B, D_OUT), out_dtype),
        grid_spec=pltpu.PrefetchScalarGridSpec(
            num_scalar_prefetch=0,
            grid=grid,
            in_specs=[
                # x: pipelined batch tiles, read in its HBM storage dtype.
                pl.BlockSpec((tb, D_IN), lambda i: (i, 0)),
                # Fused weight / bias: constant index_map -> VMEM-resident.
                pl.BlockSpec((D_IN, D_OUT), lambda i: (0, 0)),
                pl.BlockSpec((1, D_OUT), lambda i: (0, 0)),
            ],
            out_specs=pl.BlockSpec((tb, D_OUT), lambda i: (i, 0)),
        ),
        compiler_params=pltpu.CompilerParams(**cp_kwargs),
        cost_estimate=cost,
    )(x, w_fused, b_fused)


def _ref_forward(x, w1, b1, w2, b2):
    h = x @ w1.T + b1
    return h @ w2.T + b2


if __name__ == "__main__":
    key = jax.random.PRNGKey(0)
    kx, kw1, kb1, kw2, kb2 = jax.random.split(key, 5)

    B = 64
    x = jax.random.normal(kx, (B, D_IN), dtype=jnp.float32)

    # Deterministic init matching nn.Linear shapes / default init scale.
    w1 = jax.random.uniform(kw1, (D_HID, D_IN), jnp.float32, -0.0625, 0.0625)
    b1 = jax.random.uniform(kb1, (D_HID,), jnp.float32, -0.0625, 0.0625)
    w2 = jax.random.uniform(kw2, (D_OUT, D_HID), jnp.float32, -0.088, 0.088)
    b2 = jax.random.uniform(kb2, (D_OUT,), jnp.float32, -0.088, 0.088)

    ref = _ref_forward(x, w1, b1, w2, b2)

    # f32 compute path with a small tile so the batch grid has >1 step.
    p_f32 = prepare_params(w1, b1, w2, b2, io_dtype=jnp.float32)
    out_f32 = jax.block_until_ready(
        lin_model_forward(x, *p_f32, block_b=16, out_dtype=jnp.float32))
    assert out_f32.shape == (B, D_OUT)
    assert out_f32.dtype == jnp.float32
    assert jnp.allclose(out_f32, ref, atol=1e-3, rtol=1e-3), "f32 mismatch vs reference"

    # bf16 compute/output path (bandwidth-optimized default); accumulation is f32.
    p_bf16 = prepare_params(w1, b1, w2, b2, io_dtype=jnp.bfloat16)
    out_bf16 = jax.block_until_ready(lin_model_forward(x, *p_bf16))
    assert out_bf16.shape == (B, D_OUT)
    assert out_bf16.dtype == jnp.bfloat16
    assert jnp.allclose(out_bf16.astype(jnp.float32), ref, atol=5e-2, rtol=5e-2), \
        "bf16 mismatch vs reference"

    print("KERNEL_OK")
</pallas_src>

<mosaic_0001>
module attributes {stable_mosaic.version = 11 : i64} {
  func.func @_lin_model_kernel(%arg0: i32, %arg1: memref<16x256xf32, #tpu.memory_space<vmem>>, %arg2: memref<256x256xf32, #tpu.memory_space<vmem>>, %arg3: memref<1x256xf32, #tpu.memory_space<vmem>>, %arg4: memref<16x256xf32, #tpu.memory_space<vmem>>) attributes {dimension_semantics = [#tpu.dimension_semantics<parallel>], iteration_bounds = array<i64: 4>, scalar_prefetch = 0 : i64, scratch_operands = 0 : i64, tpu.core_type = #tpu.core_type<tc>, window_params = [{transform_indices = @transform_0, window_bounds = array<i64: 16, 256>}, {pipeline_mode = #tpu.pipeline_mode<synchronous>, transform_indices = @transform_1, window_bounds = array<i64: 256, 256>}, {pipeline_mode = #tpu.pipeline_mode<synchronous>, transform_indices = @transform_2, window_bounds = array<i64: 1, 256>}, {transform_indices = @transform_3, window_bounds = array<i64: 16, 256>}]} {
    %c0 = arith.constant 0 : index
    %c0_0 = arith.constant 0 : index
    %0 = vector.load %arg1[%c0, %c0_0] : memref<16x256xf32, #tpu.memory_space<vmem>>, vector<16x256xf32>
    %c0_1 = arith.constant 0 : index
    %c0_2 = arith.constant 0 : index
    %1 = vector.load %arg2[%c0_1, %c0_2] : memref<256x256xf32, #tpu.memory_space<vmem>>, vector<256x256xf32>
    %cst = arith.constant dense<0.000000e+00> : vector<16x256xf32>
    %2 = tpu.matmul %0, %1, %cst {dimension_numbers = #tpu.dot_dimension_numbers<[1], [0], [0], [1], [0, 0, 1, 1], [], []>} : vector<16x256xf32>, vector<256x256xf32>, vector<16x256xf32> -> vector<16x256xf32>
    %c0_3 = arith.constant 0 : index
    %c0_4 = arith.constant 0 : index
    %3 = vector.load %arg3[%c0_3, %c0_4] : memref<1x256xf32, #tpu.memory_space<vmem>>, vector<1x256xf32>
    %4 = vector.broadcast %3 : vector<1x256xf32> to vector<16x256xf32>
    %5 = arith.addf %2, %4 : vector<16x256xf32>
    %c0_5 = arith.constant 0 : index
    %c0_6 = arith.constant 0 : index
    %6 = vector.load %arg4[%c0_5, %c0_6] : memref<16x256xf32, #tpu.memory_space<vmem>>, vector<16x256xf32>
    tpu.vector_store %arg4[%c0_5, %c0_6], %5 {strides = array<i32>} : memref<16x256xf32, #tpu.memory_space<vmem>>, vector<16x256xf32>,
    return
  }
  func.func @transform_0(%arg0: i32) -> (i32, i32) {
    %c0_i32 = arith.constant 0 : i32
    %c0_i32_0 = arith.constant 0 : i32
    return %arg0, %c0_i32 : i32, i32
  }
  func.func @transform_1(%arg0: i32) -> (i32, i32) {
    %c0_i32 = arith.constant 0 : i32
    %c0_i32_0 = arith.constant 0 : i32
    %c0_i32_1 = arith.constant 0 : i32
    return %c0_i32, %c0_i32_0 : i32, i32
  }
  func.func @transform_2(%arg0: i32) -> (i32, i32) {
    %c0_i32 = arith.constant 0 : i32
    %c0_i32_0 = arith.constant 0 : i32
    %c0_i32_1 = arith.constant 0 : i32
    return %c0_i32, %c0_i32_0 : i32, i32
  }
  func.func @transform_3(%arg0: i32) -> (i32, i32) {
    %c0_i32 = arith.constant 0 : i32
    %c0_i32_0 = arith.constant 0 : i32
    return %arg0, %c0_i32 : i32, i32
  }
}

</mosaic_0001>

<llo_original>
// kernel: lin_model_forward.1
$region0: #{lin_model_forward.1}
  #allocation0 [shape = 'u32[]', space=smem, size = 0x4, offset = 0x4, fixed_abs, tag = 'smem constant byte address 0x4 - core index']
  #allocation1 [shape = 'u32[144,128]{1,0:T(1,128)}', space=vmem, size = 0x12000, scoped, tag = 'internal scratch']
  %s0 = inlined_call_operand.hbm [shape: f32[64,256], index: 0, kind: input, shape index: {}]
  %s1 = inlined_call_operand.hbm [shape: f32[256,256], index: 1, kind: input, shape index: {}]
  %s2 = inlined_call_operand.vmem [shape: f32[1,256], index: 2, kind: input, shape index: {}]
  %s3 = inlined_call_operand.hbm [shape: f32[64,256], index: 3, kind: output, shape index: {}]
  %s4 = sld [smem:[#allocation0]]
  $region53: #{lin_model_forward.1} parent=0
    _
  %s6 = ssub.s32 1, %s4
  %s7 = scalar_select 0, %s6, %s4
  $region1: #{lin_model_forward.1} parent=0
    #allocation2 [shape = 'u8[32768]{0}', space=vmem, size = 0x8000, scoped, tag = 'input window, operand 0']
    #allocation3 [shape = 's32[2]{0}', space=sflag, size = 0x8, scoped, tag = 'scoped memory for lin_model_forward.1']
    #allocation4 [shape = 's32[2]{0}', space=sflag, size = 0x8, scoped, tag = 'scoped memory for lin_model_forward.1']
    #allocation5 [shape = 'u8[262144]{0}', space=vmem, size = 0x40000, scoped, tag = 'input window, operand 1, single buffered']
    #allocation6 [shape = 's32[1]{0}', space=sflag, size = 0x4, scoped, tag = 'scoped memory for lin_model_forward.1']
    #allocation7 [shape = 'u8[32768]{0}', space=vmem, size = 0x8000, scoped, tag = 'output window, operand 0']
    %8 = vsyncpa [#allocation3], 0
    %s9 = scalar_lea.sflag [#allocation3], 1
    %10 = vsyncpa %s9, 0
    %11 = vsyncpa [#allocation6], 0
    %12 = vsyncpa [#allocation4], 0
    %s13 = scalar_lea.sflag [#allocation4], 1
    %14 = vsyncpa %s13, 0
    loop: start=0, step=1, limit=6
    $region2: #{lin_model_forward.1} parent=1 // loop_pre_header
      _
    $region3: #{lin_model_forward.1} parent=1 // loop_header
      %s16 = sphi 0, %s20
      %p17 = scmp.ge.s32.totalorder %s16, 6
      %s26 = sphi 0, %s28
      %s29 = sphi 0, %s26
      %s30 = sphi 0, %s29
      %s46 = sphi 0, %s30
      %s50 = sphi 0, %s50
      %s52 = sphi 0, %s50
      %s53 = sphi 0, %s52
      %s67 = sphi 0, %s53
      %s71 = sphi 0, %s71
      %s73 = sphi 0, %s71
      %s74 = sphi 0, %s73
      %s88 = sphi 0, %s74
      %s94 = sphi 0, %s96
      %s97 = sphi 0, %s94
      %s98 = sphi 0, %s97
      %s114 = sphi 0, %s98
    $region4: #{lin_model_forward.1} parent=1 // loop_header_branch
      %19 = sbr.rel (%p17) target = $region8
    $region5: #{lin_model_forward.1} parent=1 // loop_body
      %s21 = ssub.s32 %s16, 1
      %s22 = ssub.s32 %s16, 2
      %s23 = sadd.s32 %s16, 1
      %s24 = ssub.s32 %s16, %s23
      %p25 = scmp.eq.s32.totalorder %s24, 0
      %s27 = sadd.s32 %s26, 1
      %s28 = scalar_select %p25, %s26, %s27
      %p31 = pneg %p25
      %p32 = scmp.eq.s32.totalorder %s16, 3
      %p33 = por %p31, %p32
      %p34 = scmp.ne.s32.totalorder %s26, %s29
      %p35 = scmp.eq.s32.totalorder %s16, 0
      %p36 = por %p34, %p35
      %p37 = scmp.ne.s32.totalorder %s26, %s29
      %p38 = scmp.eq.s32.totalorder %s21, 3
      %p39 = por %p37, %p38
      %p40 = scmp.ne.s32.totalorder %s29, %s30
      %p41 = scmp.eq.s32.totalorder %s21, 0
      %p42 = por %p40, %p41
      %p43 = scmp.ne.s32.totalorder %s29, %s30
      %p44 = scmp.eq.s32.totalorder %s22, 3
      %p45 = por %p43, %p44
      %p47 = scmp.ne.s32.totalorder %s30, %s46
      %p48 = scmp.eq.s32.totalorder %s22, 0
      %p49 = por %p47, %p48
      %s51 = sadd.s32 %s50, 1
      %p54 = scmp.eq.s32.totalorder %s16, 3
      %p55 = scmp.ne.s32.totalorder %s50, %s52
      %p56 = scmp.eq.s32.totalorder %s16, 0
      %p57 = por %p55, %p56
      %p58 = scmp.ne.s32.totalorder %s50, %s52
      %p59 = scmp.eq.s32.totalorder %s21, 3
      %p60 = por %p58, %p59
      %p61 = scmp.ne.s32.totalorder %s52, %s53
      %p62 = scmp.eq.s32.totalorder %s21, 0
      %p63 = por %p61, %p62
      %p64 = scmp.ne.s32.totalorder %s52, %s53
      %p65 = scmp.eq.s32.totalorder %s22, 3
      %p66 = por %p64, %p65
      %p68 = scmp.ne.s32.totalorder %s53, %s67
      %p69 = scmp.eq.s32.totalorder %s22, 0
      %p70 = por %p68, %p69
      %s72 = sadd.s32 %s71, 1
      %p75 = scmp.eq.s32.totalorder %s16, 3
      %p76 = scmp.ne.s32.totalorder %s71, %s73
      %p77 = scmp.eq.s32.totalorder %s16, 0
      %p78 = por %p76, %p77
      %p79 = scmp.ne.s32.totalorder %s71, %s73
      %p80 = scmp.eq.s32.totalorder %s21, 3
      %p81 = por %p79, %p80
      %p82 = scmp.ne.s32.totalorder %s73, %s74
      %p83 = scmp.eq.s32.totalorder %s21, 0
      %p84 = por %p82, %p83
      %p85 = scmp.ne.s32.totalorder %s73, %s74
      %p86 = scmp.eq.s32.totalorder %s22, 3
      %p87 = por %p85, %p86
      %p89 = scmp.ne.s32.totalorder %s74, %s88
      %p90 = scmp.eq.s32.totalorder %s22, 0
      %p91 = por %p89, %p90
      %s92 = ssub.s32 %s16, %s23
      %p93 = scmp.eq.s32.totalorder %s92, 0
      %s95 = sadd.s32 %s94, 1
      %s96 = scalar_select %p93, %s94, %s95
      %p99 = pneg %p93
      %p100 = scmp.eq.s32.totalorder %s16, 3
      %p101 = por %p99, %p100
      %p102 = scmp.ne.s32.totalorder %s94, %s97
      %p103 = scmp.eq.s32.totalorder %s16, 0
      %p104 = por %p102, %p103
      %p105 = scmp.ne.s32.totalorder %s94, %s97
      %p106 = scmp.eq.s32.totalorder %s21, 3
      %p107 = por %p105, %p106
      %p108 = scmp.ne.s32.totalorder %s97, %s98
      %p109 = scmp.eq.s32.totalorder %s21, 0
      %p110 = por %p108, %p109
      %p111 = scmp.ne.s32.totalorder %s97, %s98
      %p112 = scmp.eq.s32.totalorder %s22, 3
      %p113 = por %p111, %p112
      %p115 = scmp.ne.s32.totalorder %s98, %s114
      %p116 = scmp.eq.s32.totalorder %s22, 0
      %p117 = por %p115, %p116
      %p118 = scmp.le.s32.totalorder 1, %s16
      %p119 = scmp.lt.s32.totalorder %s16, 5
      %p120 = pnand %p118, %p119
      %p121 = pneg %p120
      // Predicated region
      $region9: #{lin_model_forward.1} parent=5 // pred_check
        _
      $region10: #{lin_model_forward.1} parent=5 // pred_check_branch
        %123 = sbr.rel (%p120) target = $region12
      $region11: #{lin_model_forward.1} parent=5 // pred_region
        %s124 = ssub.s32 %s16, 1
        // Predicated region
        $region13: #{lin_model_forward.1} parent=11 // pred_check
          %p125 = pneg %p63
        $region14: #{lin_model_forward.1} parent=11 // pred_check_branch
          %127 = sbr.rel (%p125) target = $region16
        $region15: #{lin_model_forward.1} parent=11 // pred_region
          %s129 = ssub.s32 8192, 8192
          %130 = vsyncadd [#allocation6], %s129
          %s131 = sshll.u32 [#allocation5], 4
          %s132 = int_to_ptr.vmem [resolvable:$true] %s131
          %137 = dma.hbm_to_vmem [thread:$0]  %s1, 8192, %s132, [#allocation6], 256, 256, 16
        $region16: #{lin_model_forward.1} parent=11 // pred_fallthru
          _
        // Predicated region
        $region17: #{lin_model_forward.1} parent=11 // pred_check
          %p138 = pneg %p84
        $region18: #{lin_model_forward.1} parent=11 // pred_check_branch
          %140 = sbr.rel (%p138) target = $region20
        $region19: #{lin_model_forward.1} parent=11 // pred_region
          _
        $region20: #{lin_model_forward.1} parent=11 // pred_fallthru
          _
      $region12: #{lin_model_forward.1} parent=5 // pred_fallthru
        _
      %p141 = scmp.lt.s32.totalorder %s16, 4
      // Predicated region
      $region21: #{lin_model_forward.1} parent=5 // pred_check
        %p142 = pneg %p141
      $region22: #{lin_model_forward.1} parent=5 // pred_check_branch
        %144 = sbr.rel (%p142) target = $region24
      $region23: #{lin_model_forward.1} parent=5 // pred_region
        // Predicated region
        $region25: #{lin_model_forward.1} parent=23 // pred_check
          %p145 = pneg %p36
        $region26: #{lin_model_forward.1} parent=23 // pred_check_branch
          %147 = sbr.rel (%p145) target = $region28
        $region27: #{lin_model_forward.1} parent=23 // pred_region
          %s148 = sand.u32 %s26, 1
          %s149 = scalar_lea.sflag [#allocation3], %s148
          %s150 = sand.u32 %s26, 1
          %s151 = smul.addr %s150, 32
          %s152 = scalar_lea.vmem [#allocation2], %s151
          %s153 = smul.u32 2, %s16
          %s155 = ssub.s32 512, 512
          %156 = vsyncadd %s149, %s155
          %s157 = smul.addr %s153, 2
          %s158 = smul.addr %s157, 128
          %s159 = scalar_lea.hbm %s0, %s158
          %s160 = sshll.u32 %s152, 4
          %s161 = int_to_ptr.vmem [resolvable:$true] %s160
          %166 = dma.hbm_to_vmem [thread:$0]  %s159, 512, %s161, %s149, 256, 256, 16
        $region28: #{lin_model_forward.1} parent=23 // pred_fallthru
          _
      $region24: #{lin_model_forward.1} parent=5 // pred_fallthru
        _
      %p167 = scmp.le.s32.totalorder 1, %s16
      %p168 = scmp.lt.s32.totalorder %s16, 5
      %p169 = pnand %p167, %p168
      %p170 = pneg %p169
      // Predicated region
      $region29: #{lin_model_forward.1} parent=5 // pred_check
        _
      $region30: #{lin_model_forward.1} parent=5 // pred_check_branch
        %172 = sbr.rel (%p169) target = $region32
      $region31: #{lin_model_forward.1} parent=5 // pred_region
        %s173 = ssub.s32 %s16, 1
        %s174 = sand.u32 %s29, 1
        %s175 = scalar_lea.sflag [#allocation3], %s174
        %s176 = sand.u32 %s29, 1
        %s177 = smul.addr %s176, 32
        %s178 = scalar_lea.vmem [#allocation2], %s177
        // Predicated region
        $region33: #{lin_model_forward.1} parent=31 // pred_check
          %p179 = pneg %p42
        $region34: #{lin_model_forward.1} parent=31 // pred_check_branch
          %181 = sbr.rel (%p179) target = $region36
        $region35: #{lin_model_forward.1} parent=31 // pred_region
          %182 = dma.done %s175, 512
        $region36: #{lin_model_forward.1} parent=31 // pred_fallthru
          _
        // Predicated region
        $region37: #{lin_model_forward.1} parent=31 // pred_check
          %p183 = pneg %p63
        $region38: #{lin_model_forward.1} parent=31 // pred_check_branch
          %185 = sbr.rel (%p183) target = $region40
        $region39: #{lin_model_forward.1} parent=31 // pred_region
          %186 = dma.done [#allocation6], 8192
        $region40: #{lin_model_forward.1} parent=31 // pred_fallthru
          _
        %s187 = sand.u32 %s29, 1
        %s188 = scalar_lea.sflag [#allocation3], %s187
        %s189 = sand.u32 %s29, 1
        %s190 = smul.addr %s189, 32
        %s191 = scalar_lea.vmem [#allocation2], %s190
        %p192 = pneg %p42
        %p193 = pneg %p39
        %p194 = pneg %p63
        %p195 = pneg %p60
        %p196 = pneg %p84
        %p197 = pneg %p81
        %p198 = pneg %p110
        %p199 = pneg %p107
        %s200 = sand.u32 %s97, 1
        %s201 = scalar_lea.sflag [#allocation4], %s200
        %s202 = sand.u32 %s97, 1
        %s203 = smul.addr %s202, 32
        %s204 = scalar_lea.vmem [#allocation7], %s203
        %s205 = smul.u32 2, %s21
        %s206 = smul.u32 2, %s21
        %v207 = vld [vmem:[%s178] sm:$0xff]
        %v208 = vld [vmem:[%s178 + $0x8] sm:$0xff]
        %v209 = vld [vmem:[%s178 + $0x10] sm:$0xff]
        %v210 = vld [vmem:[%s178 + $0x18] sm:$0xff]
        %v211 = vld [vmem:[#allocation5] sm:$0xff]
        %v212 = vld [vmem:[#allocation5 + $0x8] sm:$0xff]
        %v213 = vld [vmem:[#allocation5 + $0x10] sm:$0xff]
        %v214 = vld [vmem:[#allocation5 + $0x18] sm:$0xff]
        %v215 = vld [vmem:[#allocation5 + $0x20] sm:$0xff]
        %v216 = vld [vmem:[#allocation5 + $0x28] sm:$0xff]
        %v217 = vld [vmem:[#allocation5 + $0x30] sm:$0xff]
        %v218 = vld [vmem:[#allocation5 + $0x38] sm:$0xff]
        %v219 = vld [vmem:[#allocation5 + $0x40] sm:$0xff]
        %v220 = vld [vmem:[#allocation5 + $0x48] sm:$0xff]
        %v221 = vld [vmem:[#allocation5 + $0x50] sm:$0xff]
        %v222 = vld [vmem:[#allocation5 + $0x58] sm:$0xff]
        %v223 = vld [vmem:[#allocation5 + $0x60] sm:$0xff]
        %v224 = vld [vmem:[#allocation5 + $0x68] sm:$0xff]
        %v225 = vld [vmem:[#allocation5 + $0x70] sm:$0xff]
        %v226 = vld [vmem:[#allocation5 + $0x78] sm:$0xff]
        %v227 = vld [vmem:[#allocation5 + $0x80] sm:$0xff]
        %v228 = vld [vmem:[#allocation5 + $0x88] sm:$0xff]
        %v229 = vld [vmem:[#allocation5 + $0x90] sm:$0xff]
        %v230 = vld [vmem:[#allocation5 + $0x98] sm:$0xff]
        %v231 = vld [vmem:[#allocation5 + $0xa0] sm:$0xff]
        %v232 = vld [vmem:[#allocation5 + $0xa8] sm:$0xff]
        %v233 = vld [vmem:[#allocation5 + $0xb0] sm:$0xff]
        %v234 = vld [vmem:[#allocation5 + $0xb8] sm:$0xff]
        %v235 = vld [vmem:[#allocation5 + $0xc0] sm:$0xff]
        %v236 = vld [vmem:[#allocation5 + $0xc8] sm:$0xff]
        %v237 = vld [vmem:[#allocation5 + $0xd0] sm:$0xff]
        %v238 = vld [vmem:[#allocation5 + $0xd8] sm:$0xff]
        %v239 = vld [vmem:[#allocation5 + $0xe0] sm:$0xff]
        %v240 = vld [vmem:[#allocation5 + $0xe8] sm:$0xff]
        %v241 = vld [vmem:[#allocation5 + $0xf0] sm:$0xff]
        %v242 = vld [vmem:[#allocation5 + $0xf8] sm:$0xff]
        %v243 = vld [vmem:[#allocation5 + $0x100] sm:$0xff]
        %v244 = vld [vmem:[#allocation5 + $0x108] sm:$0xff]
        %v245 = vld [vmem:[#allocation5 + $0x110] sm:$0xff]
        %v246 = vld [vmem:[#allocation5 + $0x118] sm:$0xff]
        %v247 = vld [vmem:[#allocation5 + $0x120] sm:$0xff]
        %v248 = vld [vmem:[#allocation5 + $0x128] sm:$0xff]
        %v249 = vld [vmem:[#allocation5 + $0x130] sm:$0xff]
        %v250 = vld [vmem:[#allocation5 + $0x138] sm:$0xff]
        %v251 = vld [vmem:[#allocation5 + $0x140] sm:$0xff]
        %v252 = vld [vmem:[#allocation5 + $0x148] sm:$0xff]
        %v253 = vld [vmem:[#allocation5 + $0x150] sm:$0xff]
        %v254 = vld [vmem:[#allocation5 + $0x158] sm:$0xff]
        %v255 = vld [vmem:[#allocation5 + $0x160] sm:$0xff]
        %v256 = vld [vmem:[#allocation5 + $0x168] sm:$0xff]
        %v257 = vld [vmem:[#allocation5 + $0x170] sm:$0xff]
        %v258 = vld [vmem:[#allocation5 + $0x178] sm:$0xff]
        %v259 = vld [vmem:[#allocation5 + $0x180] sm:$0xff]
        %v260 = vld [vmem:[#allocation5 + $0x188] sm:$0xff]
        %v261 = vld [vmem:[#allocation5 + $0x190] sm:$0xff]
        %v262 = vld [vmem:[#allocation5 + $0x198] sm:$0xff]
        %v263 = vld [vmem:[#allocation5 + $0x1a0] sm:$0xff]
        %v264 = vld [vmem:[#allocation5 + $0x1a8] sm:$0xff]
        %v265 = vld [vmem:[#allocation5 + $0x1b0] sm:$0xff]
        %v266 = vld [vmem:[#allocation5 + $0x1b8] sm:$0xff]
        %v267 = vld [vmem:[#allocation5 + $0x1c0] sm:$0xff]
        %v268 = vld [vmem:[#allocation5 + $0x1c8] sm:$0xff]
        %v269 = vld [vmem:[#allocation5 + $0x1d0] sm:$0xff]
        %v270 = vld [vmem:[#allocation5 + $0x1d8] sm:$0xff]
        %v271 = vld [vmem:[#allocation5 + $0x1e0] sm:$0xff]
        %v272 = vld [vmem:[#allocation5 + $0x1e8] sm:$0xff]
        %v273 = vld [vmem:[#allocation5 + $0x1f0] sm:$0xff]
        %v274 = vld [vmem:[#allocation5 + $0x1f8] sm:$0xff]
        %v275 = vld [vmem:[%s2] sm:$0x3]
        %v277 = vlaneseq
        %v278 = vshrl.u32 %v277, 7
        %v279 = vsub.s32 0, %v278
        %v280 = vrot.slane %v275, %v279
        %v281 = vlaneseq
        %v282 = vshrl.u32 %v281, 7
        %v283 = vsub.s32 1, %v282
        %v284 = vrot.slane %v275, %v283
        %287 = vmatprep.subr.mxu0 %v242
        %288 = vmatpush1.msra.mxu0 %v241
        %289 = vmatprep.subr.mxu0 %v240
        %290 = vmatpush1.msra.mxu0 %v239
        %291 = vmatprep.subr.mxu0 %v238
        %292 = vmatpush1.msra.mxu0 %v237
        %293 = vmatprep.subr.mxu0 %v236
        %294 = vmatpush1.msra.mxu0 %v235
        %295 = vmatprep.subr.mxu0 %v234
        %296 = vmatpush1.msra.mxu0 %v233
        %297 = vmatprep.subr.mxu0 %v232
        %298 = vmatpush1.msra.mxu0 %v231
        %299 = vmatprep.subr.mxu0 %v230
        %300 = vmatpush1.msra.mxu0 %v229
        %301 = vmatprep.subr.mxu0 %v228
        %302 = vmatpush1.msra.mxu0 %v227
        %303 = vmatprep.subr.mxu0 %v226
        %304 = vmatpush1.msra.mxu0 %v225
        %305 = vmatprep.subr.mxu0 %v224
        %306 = vmatpush1.msra.mxu0 %v223
        %307 = vmatprep.subr.mxu0 %v222
        %308 = vmatpush1.msra.mxu0 %v221
        %309 = vmatprep.subr.mxu0 %v220
        %310 = vmatpush1.msra.mxu0 %v219
        %311 = vmatprep.subr.mxu0 %v218
        %312 = vmatpush1.msra.mxu0 %v217
        %313 = vmatprep.subr.mxu0 %v216
        %314 = vmatpush1.msra.mxu0 %v215
        %315 = vmatprep.subr.mxu0 %v214
        %316 = vmatpush1.msra.mxu0 %v213
        %317 = vmatprep.subr.mxu0 %v212
        %318 = vmatpush1.msra.mxu0 %v211
        %319 = vmatprep.subr.mxu0 %v274
        %320 = vmatpush2.msra.mxu0 %v273
        %321 = vmatprep.subr.mxu0 %v272
        %322 = vmatpush2.msra.mxu0 %v271
        %323 = vmatprep.subr.mxu0 %v270
        %324 = vmatpush2.msra.mxu0 %v269
        %325 = vmatprep.subr.mxu0 %v268
        %326 = vmatpush2.msra.mxu0 %v267
        %327 = vmatprep.subr.mxu0 %v266
        %328 = vmatpush2.msra.mxu0 %v265
        %329 = vmatprep.subr.mxu0 %v264
        %330 = vmatpush2.msra.mxu0 %v263
        %331 = vmatprep.subr.mxu0 %v262
        %332 = vmatpush2.msra.mxu0 %v261
        %333 = vmatprep.subr.mxu0 %v260
        %334 = vmatpush2.msra.mxu0 %v259
        %335 = vmatprep.subr.mxu0 %v258
        %336 = vmatpush2.msra.mxu0 %v257
        %337 = vmatprep.subr.mxu0 %v256
        %338 = vmatpush2.msra.mxu0 %v255
        %339 = vmatprep.subr.mxu0 %v254
        %340 = vmatpush2.msra.mxu0 %v253
        %341 = vmatprep.subr.mxu0 %v252
        %342 = vmatpush2.msra.mxu0 %v251
        %343 = vmatprep.subr.mxu0 %v250
        %344 = vmatpush2.msra.mxu0 %v249
        %345 = vmatprep.subr.mxu0 %v248
        %346 = vmatpush2.msra.mxu0 %v247
        %347 = vmatprep.subr.mxu0 %v246
        %348 = vmatpush2.msra.mxu0 %v245
        %349 = vmatprep.subr.mxu0 %v244
        %350 = vmatpush2.msra.mxu0 %v243
        %351 = vmatprep.mubr.f32.mxu0 %v208
        %352 = vmatmul.mubr.f32.gmra.mxu0 %v207
        %v353 = vpop.f32.mrf.mxu0
        %v354 = vadd.f32 %v280, %v353
        %v355 = vpop.f32.mrf.mxu0
        %v356 = vadd.f32 %v284, %v355
        %357 = vmatprep.mubr.f32.mxu0 %v210
        %358 = vmatmul.mubr.f32.gmra.mxu0 %v209
        %v359 = vpop.f32.mrf.mxu0
        %v360 = vadd.f32 %v280, %v359
        %v361 = vpop.f32.mrf.mxu0
        %v362 = vadd.f32 %v284, %v361
        %363 = vdwg.mxu0
        %364 = vst [vmem:[%s204] sm:$0xff] %v354
        %365 = vst [vmem:[%s204 + $0x8] sm:$0xff] %v356
        %366 = vst [vmem:[%s204 + $0x10] sm:$0xff] %v360
        %367 = vst [vmem:[%s204 + $0x18] sm:$0xff] %v362
        %s368 = sand.u32 %s97, 1
        %s369 = scalar_lea.sflag [#allocation4], %s368
        %s370 = sand.u32 %s97, 1
        %s371 = smul.addr %s370, 32
        %s372 = scalar_lea.vmem [#allocation7], %s371
        // Predicated region
        $region41: #{lin_model_forward.1} parent=31 // pred_check
          %p373 = pneg %p107
        $region42: #{lin_model_forward.1} parent=31 // pred_check_branch
          %375 = sbr.rel (%p373) target = $region44
        $region43: #{lin_model_forward.1} parent=31 // pred_region
          %s376 = smul.u32 2, %s21
          %s378 = ssub.s32 512, 512
          %379 = vsyncadd %s369, %s378
          %s380 = smul.addr %s376, 2
          %s381 = smul.addr %s380, 128
          %s382 = scalar_lea.hbm %s3, %s381
          %s383 = sshll.u32 %s372, 4
          %s384 = int_to_ptr.vmem [resolvable:$true] %s383
          %389 = dma.vmem_to_hbm [thread:$0]  %s384, 512, %s382, %s369, 256, 256, 16
        $region44: #{lin_model_forward.1} parent=31 // pred_fallthru
          _
      $region32: #{lin_model_forward.1} parent=5 // pred_fallthru
        _
      %p390 = scmp.le.s32.totalorder 2, %s16
      // Predicated region
      $region45: #{lin_model_forward.1} parent=5 // pred_check
        %p391 = pneg %p390
      $region46: #{lin_model_forward.1} parent=5 // pred_check_branch
        %393 = sbr.rel (%p391) target = $region48
      $region47: #{lin_model_forward.1} parent=5 // pred_region
        %s394 = ssub.s32 %s16, 2
        // Predicated region
        $region49: #{lin_model_forward.1} parent=47 // pred_check
          %p395 = pneg %p113
        $region50: #{lin_model_forward.1} parent=47 // pred_check_branch
          %397 = sbr.rel (%p395) target = $region52
        $region51: #{lin_model_forward.1} parent=47 // pred_region
          %s398 = sand.u32 %s98, 1
          %s399 = scalar_lea.sflag [#allocation4], %s398
          %s400 = sand.u32 %s98, 1
          %s401 = smul.addr %s400, 32
          %s402 = scalar_lea.vmem [#allocation7], %s401
          %403 = dma.done %s399, 512
        $region52: #{lin_model_forward.1} parent=47 // pred_fallthru
          _
      $region48: #{lin_model_forward.1} parent=5 // pred_fallthru
        _
    $region6: #{lin_model_forward.1} parent=1 // loop_footer
      %s20 = sadd.s32 1, %s16
    $region7: #{lin_model_forward.1} parent=1 // loop_footer_branch
      %15 = sbr.rel target = $region3
    $region8: #{lin_model_forward.1} parent=1 // loop_exit
      _
    %404 = vsyncpa [#allocation3], 1
    %s405 = scalar_lea.sflag [#allocation3], 1
    %406 = vsyncpa %s405, 1
    %407 = vsyncpa [#allocation6], 1
    %408 = vsyncpa [#allocation4], 1
    %s409 = scalar_lea.sflag [#allocation4], 1
    %410 = vsyncpa %s409, 1

</llo_original>
